<compile_context>
chip_gen: v7x
topology: tpu7x:2x2x1
jax: 0.10.0
libtpu: 0.0.40
codegen_flags: <defaults>
</compile_context>

<pallas_src>
import jax
import jax.numpy as jnp
from jax.experimental import pallas as pl
from jax.experimental.pallas import tpu as pltpu


def mlp_kernel(x_ref, w1_ref, b1_ref, w2_ref, b2_ref, o_ref):
    # x_ref : (TM, D_in_p)       VMEM tile (pipelined over batch grid)
    # w1_ref: (D_in_p, H_p)      VMEM, resident across grid steps
    # b1_ref: (1, H_p)           VMEM, resident
    # w2_ref: (H_p, D_out_p)     VMEM, resident
    # b2_ref: (1, D_out_p)       VMEM, resident
    # o_ref : (TM, D_out_p)      VMEM tile
    x = x_ref[...]
    h = jnp.dot(x, w1_ref[...], preferred_element_type=jnp.float32) + b1_ref[...]
    h = jnp.maximum(h, 0.0)  # ReLU on the VPU (f32)
    h = h.astype(w2_ref.dtype)
    out = jnp.dot(h, w2_ref[...], preferred_element_type=jnp.float32) + b2_ref[...]
    o_ref[...] = out.astype(o_ref.dtype)


def _round_up(n, m):
    return ((n + m - 1) // m) * m


def _pad2d(a, rows, cols):
    pr, pc = rows - a.shape[0], cols - a.shape[1]
    if pr == 0 and pc == 0:
        return a
    return jnp.pad(a, ((0, pr), (0, pc)))


def mlp_forward(x, w1, b1, w2, b2, *, max_batch_tile=512,
                vmem_budget_bytes=24 * 1024 * 1024):
    """x: (B, C, H, W) or (B, D_in). Weights already (in, out) transposed."""
    B = x.shape[0]
    x2d = x.reshape(B, -1)
    d_in, hidden = w1.shape
    d_out = w2.shape[1]
    assert x2d.shape[1] == d_in

    dt = x2d.dtype
    itemsize = jnp.dtype(dt).itemsize

    # Lane-dense padding: feature dims up to multiples of 128 so the MXU
    # columns are fully occupied and the output store is an unmasked vst.
    d_in_p = _round_up(d_in, 128)
    hid_p = _round_up(hidden, 128)
    d_out_p = _round_up(d_out, 128)

    # Batch tile: multiple of 8 sublanes, as large as fits a conservative VMEM
    # budget. Pallas allocates 2 buffers per BlockSpec, so count residents and
    # tiles both at 2x (safe even on v7x's 64 MiB physical VMEM).
    b8 = _round_up(B, 8)
    w_bytes = (d_in_p * hid_p + hid_p * d_out_p + hid_p + d_out_p) * itemsize
    tm = min(max_batch_tile, b8)
    while tm > 8:
        tile_bytes = 2 * tm * (d_in_p + d_out_p) * itemsize  # 2x-buffered x + out
        if 2 * w_bytes + tile_bytes <= vmem_budget_bytes:
            break
        tm //= 2
    tm = max(_round_up(tm, 8), 8)
    b_pad = _round_up(b8, tm)

    # Zero padding is inert through dot / bias / ReLU; slice the result back.
    xp = _pad2d(x2d, b_pad, d_in_p)
    w1p = _pad2d(w1, d_in_p, hid_p)
    b1p = _pad2d(b1.reshape(1, hidden), 1, hid_p)
    w2p = _pad2d(w2, hid_p, d_out_p)
    b2p = _pad2d(b2.reshape(1, d_out), 1, d_out_p)

    grid = (b_pad // tm,)
    flops = 2 * b_pad * (d_in_p * hid_p + hid_p * d_out_p)
    bytes_accessed = (xp.size + w1p.size + b1p.size + w2p.size + b2p.size
                      + b_pad * d_out_p) * itemsize

    out_p = pl.pallas_call(
        mlp_kernel,
        out_shape=jax.ShapeDtypeStruct((b_pad, d_out_p), dt),
        grid_spec=pltpu.PrefetchScalarGridSpec(
            num_scalar_prefetch=0,
            grid=grid,
            in_specs=[
                pl.BlockSpec((tm, d_in_p), lambda i: (i, 0)),      # x tile (pipelined)
                pl.BlockSpec((d_in_p, hid_p), lambda i: (0, 0)),   # w1 (resident)
                pl.BlockSpec((1, hid_p), lambda i: (0, 0)),        # b1 (resident)
                pl.BlockSpec((hid_p, d_out_p), lambda i: (0, 0)),  # w2 (resident)
                pl.BlockSpec((1, d_out_p), lambda i: (0, 0)),      # b2 (resident)
            ],
            out_specs=pl.BlockSpec((tm, d_out_p), lambda i: (i, 0)),
        ),
        compiler_params=pltpu.CompilerParams(
            dimension_semantics=("parallel",),
            vmem_limit_bytes=max(vmem_budget_bytes, 32 * 1024 * 1024),
        ),
        cost_estimate=pl.CostEstimate(
            flops=flops, bytes_accessed=bytes_accessed, transcendentals=0
        ),
    )(xp, w1p, b1p, w2p, b2p)

    if b_pad == B and d_out_p == d_out:
        return out_p
    return out_p[:B, :d_out]


def init_params(key, input_dim, hidden_dim, output_dim):
    """Deterministic init mimicking nn.Linear's U(-1/sqrt(fan_in), 1/sqrt(fan_in))."""
    k1, k2, k3, k4 = jax.random.split(key, 4)
    bound1 = 1.0 / (input_dim ** 0.5)
    bound2 = 1.0 / (hidden_dim ** 0.5)
    # stored as (in_features, out_features) i.e. W.T relative to PyTorch
    w1 = jax.random.uniform(k1, (input_dim, hidden_dim), jnp.float32, -bound1, bound1)
    b1 = jax.random.uniform(k2, (hidden_dim,), jnp.float32, -bound1, bound1)
    w2 = jax.random.uniform(k3, (hidden_dim, output_dim), jnp.float32, -bound2, bound2)
    b2 = jax.random.uniform(k4, (output_dim,), jnp.float32, -bound2, bound2)
    return w1, b1, w2, b2


if __name__ == "__main__":
    key = jax.random.PRNGKey(0)
    kx, kp = jax.random.split(key)

    # Small shapes consistent with the module: x = (B=2, C=4, H=16, W=16),
    # so input_dim = 4*16*16 = 1024, hidden_dim = 32, output_dim = 8.
    B, C, H, W = 2, 4, 16, 16
    input_dim, hidden_dim, output_dim = C * H * W, 32, 8

    x = jax.random.normal(kx, (B, C, H, W), dtype=jnp.float32)
    w1, b1, w2, b2 = init_params(kp, input_dim, hidden_dim, output_dim)

    out = mlp_forward(x, w1, b1, w2, b2)
    jax.block_until_ready(out)

    # Pure-JAX reference check of the forward semantics.
    x2d = x.reshape(B, -1)
    ref = jnp.maximum(x2d @ w1 + b1, 0.0) @ w2 + b2
    assert out.shape == (B, output_dim)
    assert jnp.allclose(out, ref, atol=1e-5, rtol=1e-5)

    print("KERNEL_OK")
</pallas_src>

<mosaic_0001>
module attributes {stable_mosaic.version = 11 : i64} {
  func.func @mlp_kernel(%arg0: i32, %arg1: memref<8x1024xf32, #tpu.memory_space<vmem>>, %arg2: memref<1024x128xf32, #tpu.memory_space<vmem>>, %arg3: memref<1x128xf32, #tpu.memory_space<vmem>>, %arg4: memref<128x128xf32, #tpu.memory_space<vmem>>, %arg5: memref<1x128xf32, #tpu.memory_space<vmem>>, %arg6: memref<8x128xf32, #tpu.memory_space<vmem>>) attributes {dimension_semantics = [#tpu.dimension_semantics<parallel>], iteration_bounds = array<i64: 1>, scalar_prefetch = 0 : i64, scratch_operands = 0 : i64, tpu.core_type = #tpu.core_type<tc>, window_params = [{transform_indices = @transform_0, window_bounds = array<i64: 8, 1024>}, {pipeline_mode = #tpu.pipeline_mode<synchronous>, transform_indices = @transform_1, window_bounds = array<i64: 1024, 128>}, {pipeline_mode = #tpu.pipeline_mode<synchronous>, transform_indices = @transform_2, window_bounds = array<i64: 1, 128>}, {pipeline_mode = #tpu.pipeline_mode<synchronous>, transform_indices = @transform_3, window_bounds = array<i64: 128, 128>}, {pipeline_mode = #tpu.pipeline_mode<synchronous>, transform_indices = @transform_4, window_bounds = array<i64: 1, 128>}, {transform_indices = @transform_5, window_bounds = array<i64: 8, 128>}]} {
    %c0 = arith.constant 0 : index
    %c0_0 = arith.constant 0 : index
    %0 = vector.load %arg1[%c0, %c0_0] : memref<8x1024xf32, #tpu.memory_space<vmem>>, vector<8x1024xf32>
    %c0_1 = arith.constant 0 : index
    %c0_2 = arith.constant 0 : index
    %1 = vector.load %arg2[%c0_1, %c0_2] : memref<1024x128xf32, #tpu.memory_space<vmem>>, vector<1024x128xf32>
    %cst = arith.constant dense<0.000000e+00> : vector<8x128xf32>
    %2 = tpu.matmul %0, %1, %cst {dimension_numbers = #tpu.dot_dimension_numbers<[1], [0], [0], [1], [0, 0, 1, 1], [], []>} : vector<8x1024xf32>, vector<1024x128xf32>, vector<8x128xf32> -> vector<8x128xf32>
    %c0_3 = arith.constant 0 : index
    %c0_4 = arith.constant 0 : index
    %3 = vector.load %arg3[%c0_3, %c0_4] : memref<1x128xf32, #tpu.memory_space<vmem>>, vector<1x128xf32>
    %4 = vector.broadcast %3 : vector<1x128xf32> to vector<8x128xf32>
    %5 = arith.addf %2, %4 : vector<8x128xf32>
    %cst_5 = arith.constant 0.000000e+00 : f32
    %6 = vector.broadcast %cst_5 : f32 to vector<8x128xf32>
    %7 = arith.maximumf %5, %6 : vector<8x128xf32>
    %c0_6 = arith.constant 0 : index
    %c0_7 = arith.constant 0 : index
    %8 = vector.load %arg4[%c0_6, %c0_7] : memref<128x128xf32, #tpu.memory_space<vmem>>, vector<128x128xf32>
    %cst_8 = arith.constant dense<0.000000e+00> : vector<8x128xf32>
    %9 = tpu.matmul %7, %8, %cst_8 {dimension_numbers = #tpu.dot_dimension_numbers<[1], [0], [0], [1], [0, 0, 1, 1], [], []>} : vector<8x128xf32>, vector<128x128xf32>, vector<8x128xf32> -> vector<8x128xf32>
    %c0_9 = arith.constant 0 : index
    %c0_10 = arith.constant 0 : index
    %10 = vector.load %arg5[%c0_9, %c0_10] : memref<1x128xf32, #tpu.memory_space<vmem>>, vector<1x128xf32>
    %11 = vector.broadcast %10 : vector<1x128xf32> to vector<8x128xf32>
    %12 = arith.addf %9, %11 : vector<8x128xf32>
    %c0_11 = arith.constant 0 : index
    %c0_12 = arith.constant 0 : index
    %13 = vector.load %arg6[%c0_11, %c0_12] : memref<8x128xf32, #tpu.memory_space<vmem>>, vector<8x128xf32>
    tpu.vector_store %arg6[%c0_11, %c0_12], %12 {strides = array<i32>} : memref<8x128xf32, #tpu.memory_space<vmem>>, vector<8x128xf32>,
    return
  }
  func.func @transform_0(%arg0: i32) -> (i32, i32) {
    %c0_i32 = arith.constant 0 : i32
    %c0_i32_0 = arith.constant 0 : i32
    return %arg0, %c0_i32 : i32, i32
  }
  func.func @transform_1(%arg0: i32) -> (i32, i32) {
    %c0_i32 = arith.constant 0 : i32
    %c0_i32_0 = arith.constant 0 : i32
    %c0_i32_1 = arith.constant 0 : i32
    return %c0_i32, %c0_i32_0 : i32, i32
  }
  func.func @transform_2(%arg0: i32) -> (i32, i32) {
    %c0_i32 = arith.constant 0 : i32
    %c0_i32_0 = arith.constant 0 : i32
    %c0_i32_1 = arith.constant 0 : i32
    return %c0_i32, %c0_i32_0 : i32, i32
  }
  func.func @transform_3(%arg0: i32) -> (i32, i32) {
    %c0_i32 = arith.constant 0 : i32
    %c0_i32_0 = arith.constant 0 : i32
    %c0_i32_1 = arith.constant 0 : i32
    return %c0_i32, %c0_i32_0 : i32, i32
  }
  func.func @transform_4(%arg0: i32) -> (i32, i32) {
    %c0_i32 = arith.constant 0 : i32
    %c0_i32_0 = arith.constant 0 : i32
    %c0_i32_1 = arith.constant 0 : i32
    return %c0_i32, %c0_i32_0 : i32, i32
  }
  func.func @transform_5(%arg0: i32) -> (i32, i32) {
    %c0_i32 = arith.constant 0 : i32
    %c0_i32_0 = arith.constant 0 : i32
    return %arg0, %c0_i32 : i32, i32
  }
}

</mosaic_0001>

<llo_original>
// kernel: tpu_custom_call.1
$region0: #{tpu_custom_call.1}
  #allocation0 [shape = 'u32[]', space=smem, size = 0x4, offset = 0x4, fixed_abs, tag = 'smem constant byte address 0x4 - core index']
  #allocation1 [shape = 'u32[144,128]{1,0:T(1,128)}', space=vmem, size = 0x12000, scoped, tag = 'internal scratch']
  %s0 = inlined_call_operand.hbm [shape: f32[8,1024], index: 0, kind: input, shape index: {}]
  %s1 = inlined_call_operand.hbm [shape: f32[1024,128], index: 1, kind: input, shape index: {}]
  %s2 = inlined_call_operand.vmem [shape: f32[1,128], index: 2, kind: input, shape index: {}]
  %s3 = inlined_call_operand.hbm [shape: f32[128,128], index: 3, kind: input, shape index: {}]
  %s4 = inlined_call_operand.vmem [shape: f32[1,128], index: 4, kind: input, shape index: {}]
  %s5 = inlined_call_operand.hbm [shape: f32[8,128], index: 5, kind: output, shape index: {}]
  %s6 = sld [smem:[#allocation0]]
  $region42: #{tpu_custom_call.1} parent=0
    _
  %s8 = ssub.s32 1, %s6
  %s9 = scalar_select 0, %s8, %s6
  $region1: #{tpu_custom_call.1} parent=0
    #allocation2 [shape = 'u8[32768]{0}', space=vmem, size = 0x8000, scoped, tag = 'input window, operand 0, single buffered']
    #allocation3 [shape = 's32[1]{0}', space=sflag, size = 0x4, scoped, tag = 'scoped memory for tpu_custom_call.1']
    #allocation4 [shape = 's32[1]{0}', space=sflag, size = 0x4, scoped, tag = 'scoped memory for tpu_custom_call.1']
    #allocation5 [shape = 'u8[524288]{0}', space=vmem, size = 0x80000, scoped, tag = 'input window, operand 1, single buffered']
    #allocation6 [shape = 's32[1]{0}', space=sflag, size = 0x4, scoped, tag = 'scoped memory for tpu_custom_call.1']
    #allocation7 [shape = 'u8[65536]{0}', space=vmem, size = 0x10000, scoped, tag = 'input window, operand 3, single buffered']
    #allocation8 [shape = 'u8[4096]{0}', space=vmem, size = 0x1000, scoped, tag = 'output window, operand 0, single buffered']
    %10 = vsyncpa [#allocation3], 0
    %11 = vsyncpa [#allocation6], 0
    %12 = vsyncpa [#allocation4], 0
    // Predicated region
    $region2: #{tpu_custom_call.1} parent=1 // pred_check
      _
    $region3: #{tpu_custom_call.1} parent=1 // pred_check_branch
      %14 = sbr.rel (0) target = $region5
    $region4: #{tpu_custom_call.1} parent=1 // pred_region
      %s16 = ssub.s32 1024, 1024
      %17 = vsyncadd [#allocation3], %s16
      %s19 = sshll.u32 [#allocation2], 4
      %s20 = int_to_ptr.vmem [resolvable:$true] %s19
      %22 = dma.hbm_to_vmem [thread:$0]  %s0, 1024, %s20, [#allocation3]
    $region5: #{tpu_custom_call.1} parent=1 // pred_fallthru
      _
    // Predicated region
    $region6: #{tpu_custom_call.1} parent=1 // pred_check
      _
    $region7: #{tpu_custom_call.1} parent=1 // pred_check_branch
      %24 = sbr.rel (0) target = $region9
    $region8: #{tpu_custom_call.1} parent=1 // pred_region
      %s26 = ssub.s32 16384, 16384
      %27 = vsyncadd [#allocation6], %s26
      %s28 = sshll.u32 [#allocation5], 4
      %s29 = int_to_ptr.vmem [resolvable:$true] %s28
      %34 = dma.hbm_to_vmem [thread:$0]  %s1, 16384, %s29, [#allocation6], 128, 128, 8
    $region9: #{tpu_custom_call.1} parent=1 // pred_fallthru
      _
    // Predicated region
    $region10: #{tpu_custom_call.1} parent=1 // pred_check
      _
    $region11: #{tpu_custom_call.1} parent=1 // pred_check_branch
      %36 = sbr.rel (0) target = $region13
    $region12: #{tpu_custom_call.1} parent=1 // pred_region
      _
    $region13: #{tpu_custom_call.1} parent=1 // pred_fallthru
      _
    // Predicated region
    $region14: #{tpu_custom_call.1} parent=1 // pred_check
      _
    $region15: #{tpu_custom_call.1} parent=1 // pred_check_branch
      %38 = sbr.rel (0) target = $region17
    $region16: #{tpu_custom_call.1} parent=1 // pred_region
      %s40 = ssub.s32 2048, 2048
      %41 = vsyncadd [#allocation6], %s40
      %s42 = sshll.u32 [#allocation7], 4
      %s43 = int_to_ptr.vmem [resolvable:$true] %s42
      %48 = dma.hbm_to_vmem [thread:$0]  %s3, 2048, %s43, [#allocation6], 128, 128, 8
    $region17: #{tpu_custom_call.1} parent=1 // pred_fallthru
      _
    // Predicated region
    $region18: #{tpu_custom_call.1} parent=1 // pred_check
      _
    $region19: #{tpu_custom_call.1} parent=1 // pred_check_branch
      %50 = sbr.rel (0) target = $region21
    $region20: #{tpu_custom_call.1} parent=1 // pred_region
      _
    $region21: #{tpu_custom_call.1} parent=1 // pred_fallthru
      _
    // Predicated region
    $region22: #{tpu_custom_call.1} parent=1 // pred_check
      _
    $region23: #{tpu_custom_call.1} parent=1 // pred_check_branch
      %52 = sbr.rel (0) target = $region25
    $region24: #{tpu_custom_call.1} parent=1 // pred_region
      %53 = dma.done [#allocation3], 1024
    $region25: #{tpu_custom_call.1} parent=1 // pred_fallthru
      _
    // Predicated region
    $region26: #{tpu_custom_call.1} parent=1 // pred_check
      _
    $region27: #{tpu_custom_call.1} parent=1 // pred_check_branch
      %55 = sbr.rel (0) target = $region29
    $region28: #{tpu_custom_call.1} parent=1 // pred_region
      %56 = dma.done [#allocation6], 16384
    $region29: #{tpu_custom_call.1} parent=1 // pred_fallthru
      _
    // Predicated region
    $region30: #{tpu_custom_call.1} parent=1 // pred_check
      _
    $region31: #{tpu_custom_call.1} parent=1 // pred_check_branch
      %58 = sbr.rel (0) target = $region33
    $region32: #{tpu_custom_call.1} parent=1 // pred_region
      %59 = dma.done [#allocation6], 2048
    $region33: #{tpu_custom_call.1} parent=1 // pred_fallthru
      _
    %v60 = vld [vmem:[#allocation2] sm:$0xff]
    %v61 = vld [vmem:[#allocation2 + $0x8] sm:$0xff]
    %v62 = vld [vmem:[#allocation2 + $0x10] sm:$0xff]
    %v63 = vld [vmem:[#allocation2 + $0x18] sm:$0xff]
    %v64 = vld [vmem:[#allocation2 + $0x20] sm:$0xff]
    %v65 = vld [vmem:[#allocation2 + $0x28] sm:$0xff]
    %v66 = vld [vmem:[#allocation2 + $0x30] sm:$0xff]
    %v67 = vld [vmem:[#allocation2 + $0x38] sm:$0xff]
    %v68 = vld [vmem:[#allocation5] sm:$0xff]
    %v69 = vld [vmem:[#allocation5 + $0x8] sm:$0xff]
    %v70 = vld [vmem:[#allocation5 + $0x10] sm:$0xff]
    %v71 = vld [vmem:[#allocation5 + $0x18] sm:$0xff]
    %v72 = vld [vmem:[#allocation5 + $0x20] sm:$0xff]
    %v73 = vld [vmem:[#allocation5 + $0x28] sm:$0xff]
    %v74 = vld [vmem:[#allocation5 + $0x30] sm:$0xff]
    %v75 = vld [vmem:[#allocation5 + $0x38] sm:$0xff]
    %v76 = vld [vmem:[#allocation5 + $0x40] sm:$0xff]
    %v77 = vld [vmem:[#allocation5 + $0x48] sm:$0xff]
    %v78 = vld [vmem:[#allocation5 + $0x50] sm:$0xff]
    %v79 = vld [vmem:[#allocation5 + $0x58] sm:$0xff]
    %v80 = vld [vmem:[#allocation5 + $0x60] sm:$0xff]
    %v81 = vld [vmem:[#allocation5 + $0x68] sm:$0xff]
    %v82 = vld [vmem:[#allocation5 + $0x70] sm:$0xff]
    %v83 = vld [vmem:[#allocation5 + $0x78] sm:$0xff]
    %v84 = vld [vmem:[#allocation5 + $0x80] sm:$0xff]
    %v85 = vld [vmem:[#allocation5 + $0x88] sm:$0xff]
    %v86 = vld [vmem:[#allocation5 + $0x90] sm:$0xff]
    %v87 = vld [vmem:[#allocation5 + $0x98] sm:$0xff]
    %v88 = vld [vmem:[#allocation5 + $0xa0] sm:$0xff]
    %v89 = vld [vmem:[#allocation5 + $0xa8] sm:$0xff]
    %v90 = vld [vmem:[#allocation5 + $0xb0] sm:$0xff]
    %v91 = vld [vmem:[#allocation5 + $0xb8] sm:$0xff]
    %v92 = vld [vmem:[#allocation5 + $0xc0] sm:$0xff]
    %v93 = vld [vmem:[#allocation5 + $0xc8] sm:$0xff]
    %v94 = vld [vmem:[#allocation5 + $0xd0] sm:$0xff]
    %v95 = vld [vmem:[#allocation5 + $0xd8] sm:$0xff]
    %v96 = vld [vmem:[#allocation5 + $0xe0] sm:$0xff]
    %v97 = vld [vmem:[#allocation5 + $0xe8] sm:$0xff]
    %v98 = vld [vmem:[#allocation5 + $0xf0] sm:$0xff]
    %v99 = vld [vmem:[#allocation5 + $0xf8] sm:$0xff]
    %v100 = vld [vmem:[#allocation5 + $0x100] sm:$0xff]
    %v101 = vld [vmem:[#allocation5 + $0x108] sm:$0xff]
    %v102 = vld [vmem:[#allocation5 + $0x110] sm:$0xff]
    %v103 = vld [vmem:[#allocation5 + $0x118] sm:$0xff]
    %v104 = vld [vmem:[#allocation5 + $0x120] sm:$0xff]
    %v105 = vld [vmem:[#allocation5 + $0x128] sm:$0xff]
    %v106 = vld [vmem:[#allocation5 + $0x130] sm:$0xff]
    %v107 = vld [vmem:[#allocation5 + $0x138] sm:$0xff]
    %v108 = vld [vmem:[#allocation5 + $0x140] sm:$0xff]
    %v109 = vld [vmem:[#allocation5 + $0x148] sm:$0xff]
    %v110 = vld [vmem:[#allocation5 + $0x150] sm:$0xff]
    %v111 = vld [vmem:[#allocation5 + $0x158] sm:$0xff]
    %v112 = vld [vmem:[#allocation5 + $0x160] sm:$0xff]
    %v113 = vld [vmem:[#allocation5 + $0x168] sm:$0xff]
    %v114 = vld [vmem:[#allocation5 + $0x170] sm:$0xff]
    %v115 = vld [vmem:[#allocation5 + $0x178] sm:$0xff]
    %v116 = vld [vmem:[#allocation5 + $0x180] sm:$0xff]
    %v117 = vld [vmem:[#allocation5 + $0x188] sm:$0xff]
    %v118 = vld [vmem:[#allocation5 + $0x190] sm:$0xff]
    %v119 = vld [vmem:[#allocation5 + $0x198] sm:$0xff]
    %v120 = vld [vmem:[#allocation5 + $0x1a0] sm:$0xff]
    %v121 = vld [vmem:[#allocation5 + $0x1a8] sm:$0xff]
    %v122 = vld [vmem:[#allocation5 + $0x1b0] sm:$0xff]
    %v123 = vld [vmem:[#allocation5 + $0x1b8] sm:$0xff]
    %v124 = vld [vmem:[#allocation5 + $0x1c0] sm:$0xff]
    %v125 = vld [vmem:[#allocation5 + $0x1c8] sm:$0xff]
    %v126 = vld [vmem:[#allocation5 + $0x1d0] sm:$0xff]
    %v127 = vld [vmem:[#allocation5 + $0x1d8] sm:$0xff]
    %v128 = vld [vmem:[#allocation5 + $0x1e0] sm:$0xff]
    %v129 = vld [vmem:[#allocation5 + $0x1e8] sm:$0xff]
    %v130 = vld [vmem:[#allocation5 + $0x1f0] sm:$0xff]
    %v131 = vld [vmem:[#allocation5 + $0x1f8] sm:$0xff]
    %v132 = vld [vmem:[#allocation5 + $0x200] sm:$0xff]
    %v133 = vld [vmem:[#allocation5 + $0x208] sm:$0xff]
    %v134 = vld [vmem:[#allocation5 + $0x210] sm:$0xff]
    %v135 = vld [vmem:[#allocation5 + $0x218] sm:$0xff]
    %v136 = vld [vmem:[#allocation5 + $0x220] sm:$0xff]
    %v137 = vld [vmem:[#allocation5 + $0x228] sm:$0xff]
    %v138 = vld [vmem:[#allocation5 + $0x230] sm:$0xff]
    %v139 = vld [vmem:[#allocation5 + $0x238] sm:$0xff]
    %v140 = vld [vmem:[#allocation5 + $0x240] sm:$0xff]
    %v141 = vld [vmem:[#allocation5 + $0x248] sm:$0xff]
    %v142 = vld [vmem:[#allocation5 + $0x250] sm:$0xff]
    %v143 = vld [vmem:[#allocation5 + $0x258] sm:$0xff]
    %v144 = vld [vmem:[#allocation5 + $0x260] sm:$0xff]
    %v145 = vld [vmem:[#allocation5 + $0x268] sm:$0xff]
    %v146 = vld [vmem:[#allocation5 + $0x270] sm:$0xff]
    %v147 = vld [vmem:[#allocation5 + $0x278] sm:$0xff]
    %v148 = vld [vmem:[#allocation5 + $0x280] sm:$0xff]
    %v149 = vld [vmem:[#allocation5 + $0x288] sm:$0xff]
    %v150 = vld [vmem:[#allocation5 + $0x290] sm:$0xff]
    %v151 = vld [vmem:[#allocation5 + $0x298] sm:$0xff]
    %v152 = vld [vmem:[#allocation5 + $0x2a0] sm:$0xff]
    %v153 = vld [vmem:[#allocation5 + $0x2a8] sm:$0xff]
    %v154 = vld [vmem:[#allocation5 + $0x2b0] sm:$0xff]
    %v155 = vld [vmem:[#allocation5 + $0x2b8] sm:$0xff]
    %v156 = vld [vmem:[#allocation5 + $0x2c0] sm:$0xff]
    %v157 = vld [vmem:[#allocation5 + $0x2c8] sm:$0xff]
    %v158 = vld [vmem:[#allocation5 + $0x2d0] sm:$0xff]
    %v159 = vld [vmem:[#allocation5 + $0x2d8] sm:$0xff]
    %v160 = vld [vmem:[#allocation5 + $0x2e0] sm:$0xff]
    %v161 = vld [vmem:[#allocation5 + $0x2e8] sm:$0xff]
    %v162 = vld [vmem:[#allocation5 + $0x2f0] sm:$0xff]
    %v163 = vld [vmem:[#allocation5 + $0x2f8] sm:$0xff]
    %v164 = vld [vmem:[#allocation5 + $0x300] sm:$0xff]
    %v165 = vld [vmem:[#allocation5 + $0x308] sm:$0xff]
    %v166 = vld [vmem:[#allocation5 + $0x310] sm:$0xff]
    %v167 = vld [vmem:[#allocation5 + $0x318] sm:$0xff]
    %v168 = vld [vmem:[#allocation5 + $0x320] sm:$0xff]
    %v169 = vld [vmem:[#allocation5 + $0x328] sm:$0xff]
    %v170 = vld [vmem:[#allocation5 + $0x330] sm:$0xff]
    %v171 = vld [vmem:[#allocation5 + $0x338] sm:$0xff]
    %v172 = vld [vmem:[#allocation5 + $0x340] sm:$0xff]
    %v173 = vld [vmem:[#allocation5 + $0x348] sm:$0xff]
    %v174 = vld [vmem:[#allocation5 + $0x350] sm:$0xff]
    %v175 = vld [vmem:[#allocation5 + $0x358] sm:$0xff]
    %v176 = vld [vmem:[#allocation5 + $0x360] sm:$0xff]
    %v177 = vld [vmem:[#allocation5 + $0x368] sm:$0xff]
    %v178 = vld [vmem:[#allocation5 + $0x370] sm:$0xff]
    %v179 = vld [vmem:[#allocation5 + $0x378] sm:$0xff]
    %v180 = vld [vmem:[#allocation5 + $0x380] sm:$0xff]
    %v181 = vld [vmem:[#allocation5 + $0x388] sm:$0xff]
    %v182 = vld [vmem:[#allocation5 + $0x390] sm:$0xff]
    %v183 = vld [vmem:[#allocation5 + $0x398] sm:$0xff]
    %v184 = vld [vmem:[#allocation5 + $0x3a0] sm:$0xff]
    %v185 = vld [vmem:[#allocation5 + $0x3a8] sm:$0xff]
    %v186 = vld [vmem:[#allocation5 + $0x3b0] sm:$0xff]
    %v187 = vld [vmem:[#allocation5 + $0x3b8] sm:$0xff]
    %v188 = vld [vmem:[#allocation5 + $0x3c0] sm:$0xff]
    %v189 = vld [vmem:[#allocation5 + $0x3c8] sm:$0xff]
    %v190 = vld [vmem:[#allocation5 + $0x3d0] sm:$0xff]
    %v191 = vld [vmem:[#allocation5 + $0x3d8] sm:$0xff]
    %v192 = vld [vmem:[#allocation5 + $0x3e0] sm:$0xff]
    %v193 = vld [vmem:[#allocation5 + $0x3e8] sm:$0xff]
    %v194 = vld [vmem:[#allocation5 + $0x3f0] sm:$0xff]
    %v195 = vld [vmem:[#allocation5 + $0x3f8] sm:$0xff]
    %v196 = vld [vmem:[%s2] sm:$0x1]
    %v198 = vlaneseq
    %v199 = vshrl.u32 %v198, 7
    %v200 = vsub.s32 0, %v199
    %v201 = vrot.slane %v196, %v200
    %203 = vmatprep.subr.mxu0 0.0
    %204 = vmatpush1.msra.mxu0 %v68
    %205 = vmatprep.subr.mxu0 0.0
    %206 = vmatpush1.msra.mxu0 %v69
    %207 = vmatprep.subr.mxu0 0.0
    %208 = vmatpush1.msra.mxu0 %v70
    %209 = vmatprep.subr.mxu0 0.0
    %210 = vmatpush1.msra.mxu0 %v71
    %211 = vmatprep.subr.mxu0 0.0
    %212 = vmatpush1.msra.mxu0 %v72
    %213 = vmatprep.subr.mxu0 0.0
    %214 = vmatpush1.msra.mxu0 %v73
    %215 = vmatprep.subr.mxu0 0.0
    %216 = vmatpush1.msra.mxu0 %v74
    %217 = vmatprep.subr.mxu0 0.0
    %218 = vmatpush1.msra.mxu0 %v75
    %219 = vmatprep.subr.mxu0 0.0
    %220 = vmatpush1.msra.mxu0 %v76
    %221 = vmatprep.subr.mxu0 0.0
    %222 = vmatpush1.msra.mxu0 %v77
    %223 = vmatprep.subr.mxu0 0.0
    %224 = vmatpush1.msra.mxu0 %v78
    %225 = vmatprep.subr.mxu0 0.0
    %226 = vmatpush1.msra.mxu0 %v79
    %227 = vmatprep.subr.mxu0 0.0
    %228 = vmatpush1.msra.mxu0 %v80
    %229 = vmatprep.subr.mxu0 0.0
    %230 = vmatpush1.msra.mxu0 %v81
    %231 = vmatprep.subr.mxu0 0.0
    %232 = vmatpush1.msra.mxu0 %v82
    %233 = vmatprep.subr.mxu0 0.0
    %234 = vmatpush1.msra.mxu0 %v83
    %235 = vmatprep.subr.mxu0 0.0
    %236 = vmatpush1.msra.mxu0 %v84
    %237 = vmatprep.subr.mxu0 0.0
    %238 = vmatpush1.msra.mxu0 %v85
    %239 = vmatprep.subr.mxu0 0.0
    %240 = vmatpush1.msra.mxu0 %v86
    %241 = vmatprep.subr.mxu0 0.0
    %242 = vmatpush1.msra.mxu0 %v87
    %243 = vmatprep.subr.mxu0 0.0
    %244 = vmatpush1.msra.mxu0 %v88
    %245 = vmatprep.subr.mxu0 0.0
    %246 = vmatpush1.msra.mxu0 %v89
    %247 = vmatprep.subr.mxu0 0.0
    %248 = vmatpush1.msra.mxu0 %v90
    %249 = vmatprep.subr.mxu0 0.0
    %250 = vmatpush1.msra.mxu0 %v91
    %251 = vmatprep.subr.mxu0 0.0
    %252 = vmatpush1.msra.mxu0 %v92
    %253 = vmatprep.subr.mxu0 0.0
    %254 = vmatpush1.msra.mxu0 %v93
    %255 = vmatprep.subr.mxu0 0.0
    %256 = vmatpush1.msra.mxu0 %v94
    %257 = vmatprep.subr.mxu0 0.0
    %258 = vmatpush1.msra.mxu0 %v95
    %259 = vmatprep.subr.mxu0 0.0
    %260 = vmatpush1.msra.mxu0 %v96
    %261 = vmatprep.subr.mxu0 0.0
    %262 = vmatpush1.msra.mxu0 %v97
    %263 = vmatprep.subr.mxu0 0.0
    %264 = vmatpush1.msra.mxu0 %v98
    %265 = vmatprep.subr.mxu0 0.0
    %266 = vmatpush1.msra.mxu0 %v99
    %267 = vmatprep.mubr.f32.mxu0 %v61
    %268 = vmatmul.mubr.f32.gmra.mrb[0].mxu0 %v60
    %v269 = vpop.f32.mrb[0].mxu0
    %v270 = vadd.f32 %v201, %v269
    %v271 = vpop.f32.mrb[0].mxu0
    %272 = vdwg.mxu0
    %273 = vmatprep.subr.mxu0 0.0
    %274 = vmatpush1.msra.mxu0 %v100
    %275 = vmatprep.subr.mxu0 0.0
    %276 = vmatpush1.msra.mxu0 %v101
    %277 = vmatprep.subr.mxu0 0.0
    %278 = vmatpush1.msra.mxu0 %v102
    %279 = vmatprep.subr.mxu0 0.0
    %280 = vmatpush1.msra.mxu0 %v103
    %281 = vmatprep.subr.mxu0 0.0
    %282 = vmatpush1.msra.mxu0 %v104
    %283 = vmatprep.subr.mxu0 0.0
    %284 = vmatpush1.msra.mxu0 %v105
    %285 = vmatprep.subr.mxu0 0.0
    %286 = vmatpush1.msra.mxu0 %v106
    %287 = vmatprep.subr.mxu0 0.0
    %288 = vmatpush1.msra.mxu0 %v107
    %289 = vmatprep.subr.mxu0 0.0
    %290 = vmatpush1.msra.mxu0 %v108
    %291 = vmatprep.subr.mxu0 0.0
    %292 = vmatpush1.msra.mxu0 %v109
    %293 = vmatprep.subr.mxu0 0.0
    %294 = vmatpush1.msra.mxu0 %v110
    %295 = vmatprep.subr.mxu0 0.0
    %296 = vmatpush1.msra.mxu0 %v111
    %297 = vmatprep.subr.mxu0 0.0
    %298 = vmatpush1.msra.mxu0 %v112
    %299 = vmatprep.subr.mxu0 0.0
    %300 = vmatpush1.msra.mxu0 %v113
    %301 = vmatprep.subr.mxu0 0.0
    %302 = vmatpush1.msra.mxu0 %v114
    %303 = vmatprep.subr.mxu0 0.0
    %304 = vmatpush1.msra.mxu0 %v115
    %305 = vmatprep.subr.mxu0 0.0
    %306 = vmatpush1.msra.mxu0 %v116
    %307 = vmatprep.subr.mxu0 0.0
    %308 = vmatpush1.msra.mxu0 %v117
    %309 = vmatprep.subr.mxu0 0.0
    %310 = vmatpush1.msra.mxu0 %v118
    %311 = vmatprep.subr.mxu0 0.0
    %312 = vmatpush1.msra.mxu0 %v119
    %313 = vmatprep.subr.mxu0 0.0
    %314 = vmatpush1.msra.mxu0 %v120
    %315 = vmatprep.subr.mxu0 0.0
    %316 = vmatpush1.msra.mxu0 %v121
    %317 = vmatprep.subr.mxu0 0.0
    %318 = vmatpush1.msra.mxu0 %v122
    %319 = vmatprep.subr.mxu0 0.0
    %320 = vmatpush1.msra.mxu0 %v123
    %321 = vmatprep.subr.mxu0 0.0
    %322 = vmatpush1.msra.mxu0 %v124
    %323 = vmatprep.subr.mxu0 0.0
    %324 = vmatpush1.msra.mxu0 %v125
    %325 = vmatprep.subr.mxu0 0.0
    %326 = vmatpush1.msra.mxu0 %v126
    %327 = vmatprep.subr.mxu0 0.0
    %328 = vmatpush1.msra.mxu0 %v127
    %329 = vmatprep.subr.mxu0 0.0
    %330 = vmatpush1.msra.mxu0 %v128
    %331 = vmatprep.subr.mxu0 0.0
    %332 = vmatpush1.msra.mxu0 %v129
    %333 = vmatprep.subr.mxu0 0.0
    %334 = vmatpush1.msra.mxu0 %v130
    %335 = vmatprep.subr.mxu0 0.0
    %336 = vmatpush1.msra.mxu0 %v131
    %337 = vmatprep.mubr.f32.mxu0 %v63
    %338 = vmatmul.mubr.f32.gmra.mrb[0].mxu0 %v62
    %v339 = vpop.f32.mrb[0].mxu0
    %v340 = vadd.f32 %v270, %v339
    %v341 = vpop.f32.mrb[0].mxu0
    %342 = vdwg.mxu0
    %343 = vmatprep.subr.mxu0 0.0
    %344 = vmatpush1.msra.mxu0 %v132
    %345 = vmatprep.subr.mxu0 0.0
    %346 = vmatpush1.msra.mxu0 %v133
    %347 = vmatprep.subr.mxu0 0.0
    %348 = vmatpush1.msra.mxu0 %v134
    %349 = vmatprep.subr.mxu0 0.0
    %350 = vmatpush1.msra.mxu0 %v135
    %351 = vmatprep.subr.mxu0 0.0
    %352 = vmatpush1.msra.mxu0 %v136
    %353 = vmatprep.subr.mxu0 0.0
    %354 = vmatpush1.msra.mxu0 %v137
    %355 = vmatprep.subr.mxu0 0.0
    %356 = vmatpush1.msra.mxu0 %v138
    %357 = vmatprep.subr.mxu0 0.0
    %358 = vmatpush1.msra.mxu0 %v139
    %359 = vmatprep.subr.mxu0 0.0
    %360 = vmatpush1.msra.mxu0 %v140
    %361 = vmatprep.subr.mxu0 0.0
    %362 = vmatpush1.msra.mxu0 %v141
    %363 = vmatprep.subr.mxu0 0.0
    %364 = vmatpush1.msra.mxu0 %v142
    %365 = vmatprep.subr.mxu0 0.0
    %366 = vmatpush1.msra.mxu0 %v143
    %367 = vmatprep.subr.mxu0 0.0
    %368 = vmatpush1.msra.mxu0 %v144
    %369 = vmatprep.subr.mxu0 0.0
    %370 = vmatpush1.msra.mxu0 %v145
    %371 = vmatprep.subr.mxu0 0.0
    %372 = vmatpush1.msra.mxu0 %v146
    %373 = vmatprep.subr.mxu0 0.0
    %374 = vmatpush1.msra.mxu0 %v147
    %375 = vmatprep.subr.mxu0 0.0
    %376 = vmatpush1.msra.mxu0 %v148
    %377 = vmatprep.subr.mxu0 0.0
    %378 = vmatpush1.msra.mxu0 %v149
    %379 = vmatprep.subr.mxu0 0.0
    %380 = vmatpush1.msra.mxu0 %v150
    %381 = vmatprep.subr.mxu0 0.0
    %382 = vmatpush1.msra.mxu0 %v151
    %383 = vmatprep.subr.mxu0 0.0
    %384 = vmatpush1.msra.mxu0 %v152
    %385 = vmatprep.subr.mxu0 0.0
    %386 = vmatpush1.msra.mxu0 %v153
    %387 = vmatprep.subr.mxu0 0.0
    %388 = vmatpush1.msra.mxu0 %v154
    %389 = vmatprep.subr.mxu0 0.0
    %390 = vmatpush1.msra.mxu0 %v155
    %391 = vmatprep.subr.mxu0 0.0
    %392 = vmatpush1.msra.mxu0 %v156
    %393 = vmatprep.subr.mxu0 0.0
    %394 = vmatpush1.msra.mxu0 %v157
    %395 = vmatprep.subr.mxu0 0.0
    %396 = vmatpush1.msra.mxu0 %v158
    %397 = vmatprep.subr.mxu0 0.0
    %398 = vmatpush1.msra.mxu0 %v159
    %399 = vmatprep.subr.mxu0 0.0
    %400 = vmatpush1.msra.mxu0 %v160
    %401 = vmatprep.subr.mxu0 0.0
    %402 = vmatpush1.msra.mxu0 %v161
    %403 = vmatprep.subr.mxu0 0.0
    %404 = vmatpush1.msra.mxu0 %v162
    %405 = vmatprep.subr.mxu0 0.0
    %406 = vmatpush1.msra.mxu0 %v163
    %407 = vmatprep.mubr.f32.mxu0 %v65
    %408 = vmatmul.mubr.f32.gmra.mrb[0].mxu0 %v64
    %v409 = vpop.f32.mrb[0].mxu0
    %v410 = vadd.f32 %v340, %v409
    %v411 = vpop.f32.mrb[0].mxu0
    %412 = vdwg.mxu0
    %413 = vmatprep.subr.mxu0 0.0
    %414 = vmatpush1.msra.mxu0 %v164
    %415 = vmatprep.subr.mxu0 0.0
    %416 = vmatpush1.msra.mxu0 %v165
    %417 = vmatprep.subr.mxu0 0.0
    %418 = vmatpush1.msra.mxu0 %v166
    %419 = vmatprep.subr.mxu0 0.0
    %420 = vmatpush1.msra.mxu0 %v167
    %421 = vmatprep.subr.mxu0 0.0
    %422 = vmatpush1.msra.mxu0 %v168
    %423 = vmatprep.subr.mxu0 0.0
    %424 = vmatpush1.msra.mxu0 %v169
    %425 = vmatprep.subr.mxu0 0.0
    %426 = vmatpush1.msra.mxu0 %v170
    %427 = vmatprep.subr.mxu0 0.0
    %428 = vmatpush1.msra.mxu0 %v171
    %429 = vmatprep.subr.mxu0 0.0
    %430 = vmatpush1.msra.mxu0 %v172
    %431 = vmatprep.subr.mxu0 0.0
    %432 = vmatpush1.msra.mxu0 %v173
    %433 = vmatprep.subr.mxu0 0.0
    %434 = vmatpush1.msra.mxu0 %v174
    %435 = vmatprep.subr.mxu0 0.0
    %436 = vmatpush1.msra.mxu0 %v175
    %437 = vmatprep.subr.mxu0 0.0
    %438 = vmatpush1.msra.mxu0 %v176
    %439 = vmatprep.subr.mxu0 0.0
    %440 = vmatpush1.msra.mxu0 %v177
    %441 = vmatprep.subr.mxu0 0.0
    %442 = vmatpush1.msra.mxu0 %v178
    %443 = vmatprep.subr.mxu0 0.0
    %444 = vmatpush1.msra.mxu0 %v179
    %445 = vmatprep.subr.mxu0 0.0
    %446 = vmatpush1.msra.mxu0 %v180
    %447 = vmatprep.subr.mxu0 0.0
    %448 = vmatpush1.msra.mxu0 %v181
    %449 = vmatprep.subr.mxu0 0.0
    %450 = vmatpush1.msra.mxu0 %v182
    %451 = vmatprep.subr.mxu0 0.0
    %452 = vmatpush1.msra.mxu0 %v183
    %453 = vmatprep.subr.mxu0 0.0
    %454 = vmatpush1.msra.mxu0 %v184
    %455 = vmatprep.subr.mxu0 0.0
    %456 = vmatpush1.msra.mxu0 %v185
    %457 = vmatprep.subr.mxu0 0.0
    %458 = vmatpush1.msra.mxu0 %v186
    %459 = vmatprep.subr.mxu0 0.0
    %460 = vmatpush1.msra.mxu0 %v187
    %461 = vmatprep.subr.mxu0 0.0
    %462 = vmatpush1.msra.mxu0 %v188
    %463 = vmatprep.subr.mxu0 0.0
    %464 = vmatpush1.msra.mxu0 %v189
    %465 = vmatprep.subr.mxu0 0.0
    %466 = vmatpush1.msra.mxu0 %v190
    %467 = vmatprep.subr.mxu0 0.0
    %468 = vmatpush1.msra.mxu0 %v191
    %469 = vmatprep.subr.mxu0 0.0
    %470 = vmatpush1.msra.mxu0 %v192
    %471 = vmatprep.subr.mxu0 0.0
    %472 = vmatpush1.msra.mxu0 %v193
    %473 = vmatprep.subr.mxu0 0.0
    %474 = vmatpush1.msra.mxu0 %v194
    %475 = vmatprep.subr.mxu0 0.0
    %476 = vmatpush1.msra.mxu0 %v195
    %477 = vmatprep.mubr.f32.mxu0 %v67
    %478 = vmatmul.mubr.f32.gmra.mrb[0].mxu0 %v66
    %v479 = vpop.f32.mrb[0].mxu0
    %v480 = vadd.f32 %v410, %v479
    %v481 = vpop.f32.mrb[0].mxu0
    %482 = vdwg.mxu0
    %v483 = vmax.f32 %v480, 0.0
    %v484 = vld [vmem:[#allocation7] sm:$0xff]
    %v485 = vld [vmem:[#allocation7 + $0x8] sm:$0xff]
    %v486 = vld [vmem:[#allocation7 + $0x10] sm:$0xff]
    %v487 = vld [vmem:[#allocation7 + $0x18] sm:$0xff]
    %v488 = vld [vmem:[#allocation7 + $0x20] sm:$0xff]
    %v489 = vld [vmem:[#allocation7 + $0x28] sm:$0xff]
    %v490 = vld [vmem:[#allocation7 + $0x30] sm:$0xff]
    %v491 = vld [vmem:[#allocation7 + $0x38] sm:$0xff]
    %v492 = vld [vmem:[#allocation7 + $0x40] sm:$0xff]
    %v493 = vld [vmem:[#allocation7 + $0x48] sm:$0xff]
    %v494 = vld [vmem:[#allocation7 + $0x50] sm:$0xff]
    %v495 = vld [vmem:[#allocation7 + $0x58] sm:$0xff]
    %v496 = vld [vmem:[#allocation7 + $0x60] sm:$0xff]
    %v497 = vld [vmem:[#allocation7 + $0x68] sm:$0xff]
    %v498 = vld [vmem:[#allocation7 + $0x70] sm:$0xff]
    %v499 = vld [vmem:[#allocation7 + $0x78] sm:$0xff]
    %v500 = vld [vmem:[%s4] sm:$0x1]
    %v502 = vlaneseq
    %v503 = vshrl.u32 %v502, 7
    %v504 = vsub.s32 0, %v503
    %v505 = vrot.slane %v500, %v504
    %507 = vmatprep.subr.mxu0 0.0
    %508 = vmatpush1.msra.mxu0 %v484
    %509 = vmatprep.subr.mxu0 0.0
    %510 = vmatpush1.msra.mxu0 %v485
    %511 = vmatprep.subr.mxu0 0.0
    %512 = vmatpush1.msra.mxu0 %v486
    %513 = vmatprep.subr.mxu0 0.0
    %514 = vmatpush1.msra.mxu0 %v487
    %515 = vmatprep.subr.mxu0 0.0
    %516 = vmatpush1.msra.mxu0 %v488
    %517 = vmatprep.subr.mxu0 0.0
    %518 = vmatpush1.msra.mxu0 %v489
    %519 = vmatprep.subr.mxu0 0.0
    %520 = vmatpush1.msra.mxu0 %v490
    %521 = vmatprep.subr.mxu0 0.0
    %522 = vmatpush1.msra.mxu0 %v491
    %523 = vmatprep.subr.mxu0 0.0
    %524 = vmatpush1.msra.mxu0 %v492
    %525 = vmatprep.subr.mxu0 0.0
    %526 = vmatpush1.msra.mxu0 %v493
    %527 = vmatprep.subr.mxu0 0.0
    %528 = vmatpush1.msra.mxu0 %v494
    %529 = vmatprep.subr.mxu0 0.0
    %530 = vmatpush1.msra.mxu0 %v495
    %531 = vmatprep.subr.mxu0 0.0
    %532 = vmatpush1.msra.mxu0 %v496
    %533 = vmatprep.subr.mxu0 0.0
    %534 = vmatpush1.msra.mxu0 %v497
    %535 = vmatprep.subr.mxu0 0.0
    %536 = vmatpush1.msra.mxu0 %v498
    %537 = vmatprep.subr.mxu0 0.0
    %538 = vmatpush1.msra.mxu0 %v499
    %539 = vmatprep.subr.mxu0 0.0
    %540 = vmatpush1.msra.mxu0 0.0
    %541 = vmatprep.subr.mxu0 0.0
    %542 = vmatpush1.msra.mxu0 0.0
    %543 = vmatprep.subr.mxu0 0.0
    %544 = vmatpush1.msra.mxu0 0.0
    %545 = vmatprep.subr.mxu0 0.0
    %546 = vmatpush1.msra.mxu0 0.0
    %547 = vmatprep.subr.mxu0 0.0
    %548 = vmatpush1.msra.mxu0 0.0
    %549 = vmatprep.subr.mxu0 0.0
    %550 = vmatpush1.msra.mxu0 0.0
    %551 = vmatprep.subr.mxu0 0.0
    %552 = vmatpush1.msra.mxu0 0.0
    %553 = vmatprep.subr.mxu0 0.0
    %554 = vmatpush1.msra.mxu0 0.0
    %555 = vmatprep.subr.mxu0 0.0
    %556 = vmatpush1.msra.mxu0 0.0
    %557 = vmatprep.subr.mxu0 0.0
    %558 = vmatpush1.msra.mxu0 0.0
    %559 = vmatprep.subr.mxu0 0.0
    %560 = vmatpush1.msra.mxu0 0.0
    %561 = vmatprep.subr.mxu0 0.0
    %562 = vmatpush1.msra.mxu0 0.0
    %563 = vmatprep.subr.mxu0 0.0
    %564 = vmatpush1.msra.mxu0 0.0
    %565 = vmatprep.subr.mxu0 0.0
    %566 = vmatpush1.msra.mxu0 0.0
    %567 = vmatprep.subr.mxu0 0.0
    %568 = vmatpush1.msra.mxu0 0.0
    %569 = vmatprep.subr.mxu0 0.0
    %570 = vmatpush1.msra.mxu0 0.0
    %571 = vmatprep.mubr.f32.mxu0 0.0
    %572 = vmatmul.mubr.f32.gmra.mrb[0].mxu0 %v483
    %v573 = vpop.f32.mrb[0].mxu0
    %v574 = vadd.f32 %v505, %v573
    %v575 = vpop.f32.mrb[0].mxu0
    %576 = vdwg.mxu0
    %577 = vst [vmem:[#allocation8] sm:$0xff] %v574
    // Predicated region
    $region34: #{tpu_custom_call.1} parent=1 // pred_check
      _
    $region35: #{tpu_custom_call.1} parent=1 // pred_check_branch
      %579 = sbr.rel (0) target = $region37
    $region36: #{tpu_custom_call.1} parent=1 // pred_region
      %s581 = ssub.s32 128, 128
      %582 = vsyncadd [#allocation4], %s581
      %s584 = sshll.u32 [#allocation8], 4
      %s585 = int_to_ptr.vmem [resolvable:$true] %s584
      %587 = dma.vmem_to_hbm [thread:$0]  %s585, 128, %s5, [#allocation4]
    $region37: #{tpu_custom_call.1} parent=1 // pred_fallthru
      _
    // Predicated region
    $region38: #{tpu_custom_call.1} parent=1 // pred_check
      _
    $region39: #{tpu_custom_call.1} parent=1 // pred_check_branch
      %589 = sbr.rel (0) target = $region41
    $region40: #{tpu_custom_call.1} parent=1 // pred_region
      %590 = dma.done [#allocation4], 128
    $region41: #{tpu_custom_call.1} parent=1 // pred_fallthru
      _
    %591 = vsyncpa [#allocation3], 1
    %592 = vsyncpa [#allocation6], 1
    %593 = vsyncpa [#allocation4], 1

</llo_original>
